<compile_context>
chip_gen: v7x
topology: tpu7x:2x2x1
jax: 0.10.0
libtpu: 0.0.40
codegen_flags: <defaults>
</compile_context>

<pallas_src>
import numpy as np
import jax
import jax.numpy as jnp
from jax.experimental import pallas as pl
from jax.experimental.pallas import tpu as pltpu


def _round_up(x, m):
    return ((x + m - 1) // m) * m


def _ofa_score_kernel(ref_ref, colsum_ref, x_ref, w_ref, out_ref, acc_ref):
    """Grid: (i = mask-batch block [parallel], k = feature chunk [reduction]).

    ref_ref:    [1, Dp]   reference embedding (f32, resident every step)
    colsum_ref: [1, Dp]   column sums of W (f32, resident) — Normalize fold
    x_ref:      [TN, TK]  chunk of flattened masked images (bf16, raw [0,1] pixels)
    w_ref:      [TK, Dp]  chunk of surrogate encoder weights (bf16)
    out_ref:    [TN, 1]   cosine scores (written on the last K step)
    acc_ref:    [TN, Dp]  f32 VMEM accumulator for x @ W
    """
    k = pl.program_id(1)

    @pl.when(k == 0)
    def _():
        acc_ref[...] = jnp.zeros_like(acc_ref)

    # Surrogate "ss_model.encode": bf16 MXU matmul, f32 accumulation.
    acc_ref[...] += jnp.dot(x_ref[...], w_ref[...],
                            preferred_element_type=jnp.float32)

    @pl.when(k == pl.num_programs(1) - 1)
    def _():
        # Normalize(mean=[0.5]*3, std=[0.5]*3) folded into the epilogue:
        #   ((x - 0.5) / 0.5) @ W = 2 * (x @ W) - colsum(W)
        gen_e = 2.0 * acc_ref[...] - colsum_ref[...]             # [TN, Dp]
        ref_e = ref_ref[...]                                     # [1, Dp]
        eps = 1e-12                                              # F.normalize eps
        dots = jnp.sum(gen_e * ref_e, axis=-1, keepdims=True)    # [TN, 1]
        gen_n = jnp.sqrt(jnp.sum(gen_e * gen_e, axis=-1, keepdims=True))
        ref_n = jnp.sqrt(jnp.sum(ref_e * ref_e, axis=-1, keepdims=True))
        out_ref[...] = dots / jnp.maximum(gen_n * ref_n, eps)


def ofa_wrapper_forward(ref_e, masked_imgs, w_enc, *, tk=None):
    """Returns cosine scores, shape [N] float32 (mirrors np.array(cosine_scores))."""
    # TODO(synk): model.generate (OFA beam search), tokenizer.batch_decode,
    # PIL convert('RGB') and bicubic Resize have no Pallas equivalent; replaced
    # by a deterministic linear surrogate encoder on the normalized pixels.
    N = masked_imgs.shape[0]
    F = int(np.prod(masked_imgs.shape[1:]))
    D = ref_e.shape[-1]
    assert w_enc.shape == (F, D)

    # ---- layout padding: lane-dense D, sublane-dense N --------------------
    D_pad = _round_up(D, 128)
    N_pad = _round_up(N, 8)
    if N_pad <= 256:
        tn = N_pad                      # single batch block
    else:
        tn = 256                        # dense MXU rows; feeds both v7x TCs
        N_pad = _round_up(N_pad, tn)

    # ---- VMEM budget & contraction tile -----------------------------------
    try:
        vmem_cap = int(pltpu.get_tpu_info().vmem_capacity_bytes)
    except Exception:
        vmem_cap = 64 * 1024 * 1024     # conservative (v7x per-TC)
    vmem_limit_bytes = int(vmem_cap * 0.8)
    tile_budget = int(vmem_cap * 0.6)   # leave headroom for compiler scratch

    if tk is None:
        resident = tn * D_pad * 4             # f32 accumulator
        resident += 2 * 2 * (D_pad * 4)       # ref + colsum, double-buffered
        resident += 2 * tn * 4                # output block
        per_k_unit = 2 * (tn * 2 + D_pad * 2)  # dbl-buffered bf16 x + w per tk elem
        tk_cap = (tile_budget - resident) // per_k_unit
        tk_cap = max(512, min(int(tk_cap), 8192))
        tk_cap = (tk_cap // 128) * 128
        if F <= tk_cap:
            tk = F                       # single K step: block == full extent
        else:
            tk = tk_cap                  # multiple of 128
    F_pad = F if tk == F else _round_up(F, tk)

    # ---- prepare operands (bf16 streaming, zero padding) -------------------
    x = masked_imgs.reshape(N, F).astype(jnp.bfloat16)
    if (N_pad != N) or (F_pad != F):
        x = jnp.pad(x, ((0, N_pad - N), (0, F_pad - F)))

    colsum = jnp.sum(w_enc.astype(jnp.float32), axis=0, keepdims=True)  # [1, D]
    w = w_enc.astype(jnp.bfloat16)
    if (F_pad != F) or (D_pad != D):
        w = jnp.pad(w, ((0, F_pad - F), (0, D_pad - D)))
    ref2d = ref_e.reshape(1, D).astype(jnp.float32)
    if D_pad != D:
        ref2d = jnp.pad(ref2d, ((0, 0), (0, D_pad - D)))
        colsum = jnp.pad(colsum, ((0, 0), (0, D_pad - D)))

    grid = (N_pad // tn, F_pad // tk)

    out = pl.pallas_call(
        _ofa_score_kernel,
        out_shape=jax.ShapeDtypeStruct((N_pad, 1), jnp.float32),
        grid_spec=pltpu.PrefetchScalarGridSpec(
            num_scalar_prefetch=0,
            grid=grid,
            in_specs=[
                pl.BlockSpec((1, D_pad), lambda i, k: (0, 0)),    # ref_e (resident)
                pl.BlockSpec((1, D_pad), lambda i, k: (0, 0)),    # colsum(W)
                pl.BlockSpec((tn, tk), lambda i, k: (i, k)),      # image chunk (bf16)
                pl.BlockSpec((tk, D_pad), lambda i, k: (k, 0)),   # weight chunk (bf16)
            ],
            out_specs=pl.BlockSpec((tn, 1), lambda i, k: (i, 0)),
            scratch_shapes=[pltpu.VMEM((tn, D_pad), jnp.float32)],
        ),
        compiler_params=pltpu.CompilerParams(
            dimension_semantics=("parallel", "arbitrary"),
            vmem_limit_bytes=vmem_limit_bytes,
        ),
    )(ref2d, colsum, x, w)
    return out[:N, 0]


def _reference(ref_e, masked_imgs, w_enc):
    """Pure-JAX f32 reference for correctness checking."""
    N = masked_imgs.shape[0]
    x = masked_imgs.reshape(N, -1).astype(jnp.float32)
    xn = (x - 0.5) / 0.5
    gen_e = xn @ w_enc.astype(jnp.float32)
    ref = ref_e.reshape(1, -1).astype(jnp.float32)
    num = jnp.sum(gen_e * ref, axis=-1)
    den = jnp.maximum(
        jnp.linalg.norm(gen_e, axis=-1) * jnp.linalg.norm(ref, axis=-1), 1e-12)
    return num / den


if __name__ == "__main__":
    key = jax.random.PRNGKey(0)
    k_img, k_ref, k_w = jax.random.split(key, 3)

    N, C, H, W = 2, 3, 16, 16      # small masked-image batch, RGB 16x16
    D = 32                         # embedding dim of the similarity model
    F = C * H * W                  # 768

    # masked images in [0, 1] (what ToTensor produces), NCHW layout
    masked_imgs = jax.random.uniform(k_img, (N, C, H, W), dtype=jnp.float32)
    # reference embedding ref_e: [1, D]
    ref_e = jax.random.normal(k_ref, (1, D), dtype=jnp.float32)
    # deterministic surrogate encoder weights: [F, D]
    w_enc = jax.random.normal(k_w, (F, D), dtype=jnp.float32) / np.sqrt(F)

    scores = ofa_wrapper_forward(ref_e, masked_imgs, w_enc)
    scores = jax.block_until_ready(scores)

    ref_scores = _reference(ref_e, masked_imgs, w_enc)
    # bf16 streaming of x / W -> looser tolerance than the pure-f32 path.
    np.testing.assert_allclose(np.asarray(scores), np.asarray(ref_scores),
                               rtol=3e-2, atol=3e-2)
    print("KERNEL_OK")
</pallas_src>

<mosaic_0001>
module attributes {stable_mosaic.version = 11 : i64} {
  func.func @_ofa_score_kernel(%arg0: i32, %arg1: i32, %arg2: memref<1x128xf32, #tpu.memory_space<vmem>>, %arg3: memref<1x128xf32, #tpu.memory_space<vmem>>, %arg4: memref<8x768xbf16, #tpu.memory_space<vmem>>, %arg5: memref<768x128xbf16, #tpu.memory_space<vmem>>, %arg6: memref<8x1xf32, #tpu.memory_space<vmem>>, %arg7: memref<8x128xf32, #tpu.memory_space<vmem>>) attributes {dimension_semantics = [#tpu.dimension_semantics<parallel>, #tpu.dimension_semantics<arbitrary>], iteration_bounds = array<i64: 1, 1>, scalar_prefetch = 0 : i64, scratch_operands = 1 : i64, tpu.core_type = #tpu.core_type<tc>, window_params = [{pipeline_mode = #tpu.pipeline_mode<synchronous>, transform_indices = @transform_0, window_bounds = array<i64: 1, 128>}, {pipeline_mode = #tpu.pipeline_mode<synchronous>, transform_indices = @transform_1, window_bounds = array<i64: 1, 128>}, {transform_indices = @transform_2, window_bounds = array<i64: 8, 768>}, {transform_indices = @transform_3, window_bounds = array<i64: 768, 128>}, {transform_indices = @transform_4, window_bounds = array<i64: 8, 1>}]} {
    %c0_i32 = arith.constant 0 : i32
    %0 = arith.cmpi eq, %arg1, %c0_i32 : i32
    %1 = arith.extui %0 : i1 to i32
    %c0_i32_0 = arith.constant 0 : i32
    %2 = arith.cmpi ne, %1, %c0_i32_0 : i32
    scf.if %2 {
      %cst_10 = arith.constant 0.000000e+00 : f32
      %12 = vector.broadcast %cst_10 : f32 to vector<8x128xf32>
      %c0_11 = arith.constant 0 : index
      %c0_12 = arith.constant 0 : index
      %13 = vector.load %arg7[%c0_11, %c0_12] : memref<8x128xf32, #tpu.memory_space<vmem>>, vector<8x128xf32>
      tpu.vector_store %arg7[%c0_11, %c0_12], %12 {strides = array<i32>} : memref<8x128xf32, #tpu.memory_space<vmem>>, vector<8x128xf32>,
    } else {
    }
    %c0 = arith.constant 0 : index
    %c0_1 = arith.constant 0 : index
    %3 = vector.load %arg7[%c0, %c0_1] : memref<8x128xf32, #tpu.memory_space<vmem>>, vector<8x128xf32>
    %c0_2 = arith.constant 0 : index
    %c0_3 = arith.constant 0 : index
    %4 = vector.load %arg4[%c0_2, %c0_3] : memref<8x768xbf16, #tpu.memory_space<vmem>>, vector<8x768xbf16>
    %c0_4 = arith.constant 0 : index
    %c0_5 = arith.constant 0 : index
    %5 = vector.load %arg5[%c0_4, %c0_5] : memref<768x128xbf16, #tpu.memory_space<vmem>>, vector<768x128xbf16>
    %cst = arith.constant dense<0.000000e+00> : vector<8x128xf32>
    %6 = tpu.matmul %4, %5, %cst {dimension_numbers = #tpu.dot_dimension_numbers<[1], [0], [0], [1], [0, 0, 1, 1], [], []>} : vector<8x768xbf16>, vector<768x128xbf16>, vector<8x128xf32> -> vector<8x128xf32>
    %7 = arith.addf %3, %6 : vector<8x128xf32>
    %c0_6 = arith.constant 0 : index
    %c0_7 = arith.constant 0 : index
    %8 = vector.load %arg7[%c0_6, %c0_7] : memref<8x128xf32, #tpu.memory_space<vmem>>, vector<8x128xf32>
    tpu.vector_store %arg7[%c0_6, %c0_7], %7 {strides = array<i32>} : memref<8x128xf32, #tpu.memory_space<vmem>>, vector<8x128xf32>,
    %c0_i32_8 = arith.constant 0 : i32
    %9 = arith.cmpi eq, %arg1, %c0_i32_8 : i32
    %10 = arith.extui %9 : i1 to i32
    %c0_i32_9 = arith.constant 0 : i32
    %11 = arith.cmpi ne, %10, %c0_i32_9 : i32
    scf.if %11 {
      %c0_10 = arith.constant 0 : index
      %c0_11 = arith.constant 0 : index
      %12 = vector.load %arg7[%c0_10, %c0_11] : memref<8x128xf32, #tpu.memory_space<vmem>>, vector<8x128xf32>
      %cst_12 = arith.constant 2.000000e+00 : f32
      %13 = vector.broadcast %cst_12 : f32 to vector<8x128xf32>
      %14 = arith.mulf %13, %12 : vector<8x128xf32>
      %c0_13 = arith.constant 0 : index
      %c0_14 = arith.constant 0 : index
      %15 = vector.load %arg3[%c0_13, %c0_14] : memref<1x128xf32, #tpu.memory_space<vmem>>, vector<1x128xf32>
      %16 = vector.broadcast %15 : vector<1x128xf32> to vector<8x128xf32>
      %17 = arith.subf %14, %16 : vector<8x128xf32>
      %c0_15 = arith.constant 0 : index
      %c0_16 = arith.constant 0 : index
      %18 = vector.load %arg2[%c0_15, %c0_16] : memref<1x128xf32, #tpu.memory_space<vmem>>, vector<1x128xf32>
      %19 = vector.broadcast %18 : vector<1x128xf32> to vector<8x128xf32>
      %20 = arith.mulf %17, %19 : vector<8x128xf32>
      %cst_17 = arith.constant dense<0.000000e+00> : vector<8xf32>
      %21 = vector.multi_reduction <add>, %20, %cst_17 [1] : vector<8x128xf32> to vector<8xf32>
      %22 = vector.shape_cast %21 : vector<8xf32> to vector<8x1xf32>
      %23 = arith.mulf %17, %17 : vector<8x128xf32>
      %cst_18 = arith.constant dense<0.000000e+00> : vector<8xf32>
      %24 = vector.multi_reduction <add>, %23, %cst_18 [1] : vector<8x128xf32> to vector<8xf32>
      %25 = vector.shape_cast %24 : vector<8xf32> to vector<8x1xf32>
      %26 = math.sqrt %25 : vector<8x1xf32>
      %27 = arith.mulf %18, %18 : vector<1x128xf32>
      %cst_19 = arith.constant dense<0.000000e+00> : vector<1xf32>
      %28 = vector.multi_reduction <add>, %27, %cst_19 [1] : vector<1x128xf32> to vector<1xf32>
      %29 = vector.shape_cast %28 : vector<1xf32> to vector<1x1xf32>
      %30 = math.sqrt %29 : vector<1x1xf32>
      %31 = vector.broadcast %30 : vector<1x1xf32> to vector<8x1xf32>
      %32 = arith.mulf %26, %31 : vector<8x1xf32>
      %cst_20 = arith.constant 9.99999996E-13 : f32
      %33 = vector.broadcast %cst_20 : f32 to vector<8x1xf32>
      %34 = arith.maximumf %32, %33 : vector<8x1xf32>
      %35 = arith.divf %22, %34 : vector<8x1xf32>
      %c0_21 = arith.constant 0 : index
      %c0_22 = arith.constant 0 : index
      %36 = vector.load %arg6[%c0_21, %c0_22] : memref<8x1xf32, #tpu.memory_space<vmem>>, vector<8x1xf32>
      tpu.vector_store %arg6[%c0_21, %c0_22], %35 {strides = array<i32>} : memref<8x1xf32, #tpu.memory_space<vmem>>, vector<8x1xf32>,
    } else {
    }
    return
  }
  func.func @transform_0(%arg0: i32, %arg1: i32) -> (i32, i32) {
    %c0_i32 = arith.constant 0 : i32
    %c0_i32_0 = arith.constant 0 : i32
    %c0_i32_1 = arith.constant 0 : i32
    return %c0_i32, %c0_i32_0 : i32, i32
  }
  func.func @transform_1(%arg0: i32, %arg1: i32) -> (i32, i32) {
    %c0_i32 = arith.constant 0 : i32
    %c0_i32_0 = arith.constant 0 : i32
    %c0_i32_1 = arith.constant 0 : i32
    return %c0_i32, %c0_i32_0 : i32, i32
  }
  func.func @transform_2(%arg0: i32, %arg1: i32) -> (i32, i32) {
    %c0_i32 = arith.constant 0 : i32
    return %arg0, %arg1 : i32, i32
  }
  func.func @transform_3(%arg0: i32, %arg1: i32) -> (i32, i32) {
    %c0_i32 = arith.constant 0 : i32
    %c0_i32_0 = arith.constant 0 : i32
    return %arg1, %c0_i32 : i32, i32
  }
  func.func @transform_4(%arg0: i32, %arg1: i32) -> (i32, i32) {
    %c0_i32 = arith.constant 0 : i32
    %c0_i32_0 = arith.constant 0 : i32
    return %arg0, %c0_i32 : i32, i32
  }
}

</mosaic_0001>

<llo_original>
// kernel: tpu_custom_call.1
$region0: #{tpu_custom_call.1}
  #allocation0 [shape = 'u32[]', space=smem, size = 0x4, offset = 0x4, fixed_abs, tag = 'smem constant byte address 0x4 - core index']
  #allocation1 [shape = 'u32[144,128]{1,0:T(1,128)}', space=vmem, size = 0x12000, scoped, tag = 'internal scratch']
  #allocation2 [shape = 'f32[8,128]{1,0:T(8,128)}', space=vmem, size = 0x1000, scoped, tag = 'scratch operand']
  %s0 = inlined_call_operand.hbm [shape: f32[1,128], index: 0, kind: input, shape index: {}]
  %s1 = inlined_call_operand.vmem [shape: f32[1,128], index: 1, kind: input, shape index: {}]
  %s2 = inlined_call_operand.hbm [shape: bf16[8,768], index: 2, kind: input, shape index: {}]
  %s3 = inlined_call_operand.hbm [shape: bf16[768,128], index: 3, kind: input, shape index: {}]
  %s4 = inlined_call_operand.vmem [shape: f32[8,1], index: 4, kind: output, shape index: {}]
  %s5 = sld [smem:[#allocation0]]
  $region46: #{tpu_custom_call.1} parent=0
    _
  %s7 = ssub.s32 1, %s5
  %s8 = scalar_select 0, %s7, %s5
  $region1: #{tpu_custom_call.1} parent=0
    #allocation3 [shape = 'u8[512]{0}', space=vmem, size = 0x400, scoped, tag = 'input window, operand 0, single buffered']
    #allocation4 [shape = 's32[1]{0}', space=sflag, size = 0x4, scoped, tag = 'scoped memory for tpu_custom_call.1']
    #allocation5 [shape = 'u8[12288]{0}', space=vmem, size = 0x3000, scoped, tag = 'input window, operand 2, single buffered']
    #allocation6 [shape = 's32[1]{0}', space=sflag, size = 0x4, scoped, tag = 'scoped memory for tpu_custom_call.1']
    #allocation7 [shape = 'u8[196608]{0}', space=vmem, size = 0x30000, scoped, tag = 'input window, operand 3, single buffered']
    %9 = vsyncpa [#allocation4], 0
    %10 = vsyncpa [#allocation6], 0
    // Predicated region
    $region2: #{tpu_custom_call.1} parent=1 // pred_check
      _
    $region3: #{tpu_custom_call.1} parent=1 // pred_check_branch
      %12 = sbr.rel (0) target = $region5
    $region4: #{tpu_custom_call.1} parent=1 // pred_region
      %s14 = ssub.s32 16, 16
      %15 = vsyncadd [#allocation4], %s14
      %s17 = sshll.u32 [#allocation3], 4
      %s18 = int_to_ptr.vmem [resolvable:$true] %s17
      %20 = dma.hbm_to_vmem [thread:$0]  %s0, 16, %s18, [#allocation4]
    $region5: #{tpu_custom_call.1} parent=1 // pred_fallthru
      _
    // Predicated region
    $region6: #{tpu_custom_call.1} parent=1 // pred_check
      _
    $region7: #{tpu_custom_call.1} parent=1 // pred_check_branch
      %22 = sbr.rel (0) target = $region9
    $region8: #{tpu_custom_call.1} parent=1 // pred_region
      _
    $region9: #{tpu_custom_call.1} parent=1 // pred_fallthru
      _
    // Predicated region
    $region10: #{tpu_custom_call.1} parent=1 // pred_check
      _
    $region11: #{tpu_custom_call.1} parent=1 // pred_check_branch
      %24 = sbr.rel (0) target = $region13
    $region12: #{tpu_custom_call.1} parent=1 // pred_region
      %s26 = ssub.s32 384, 384
      %27 = vsyncadd [#allocation6], %s26
      %s29 = sshll.u32 [#allocation5], 4
      %s30 = int_to_ptr.vmem [resolvable:$true] %s29
      %32 = dma.hbm_to_vmem [thread:$0]  %s2, 384, %s30, [#allocation6]
    $region13: #{tpu_custom_call.1} parent=1 // pred_fallthru
      _
    // Predicated region
    $region14: #{tpu_custom_call.1} parent=1 // pred_check
      _
    $region15: #{tpu_custom_call.1} parent=1 // pred_check_branch
      %34 = sbr.rel (0) target = $region17
    $region16: #{tpu_custom_call.1} parent=1 // pred_region
      %s36 = ssub.s32 6144, 6144
      %37 = vsyncadd [#allocation6], %s36
      %s38 = sshll.u32 [#allocation7], 4
      %s39 = int_to_ptr.vmem [resolvable:$true] %s38
      %44 = dma.hbm_to_vmem [thread:$0]  %s3, 6144, %s39, [#allocation6], 64, 64, 4
    $region17: #{tpu_custom_call.1} parent=1 // pred_fallthru
      _
    // Predicated region
    $region18: #{tpu_custom_call.1} parent=1 // pred_check
      _
    $region19: #{tpu_custom_call.1} parent=1 // pred_check_branch
      %46 = sbr.rel (0) target = $region21
    $region20: #{tpu_custom_call.1} parent=1 // pred_region
      %47 = dma.done [#allocation4], 16
    $region21: #{tpu_custom_call.1} parent=1 // pred_fallthru
      _
    // Predicated region
    $region22: #{tpu_custom_call.1} parent=1 // pred_check
      _
    $region23: #{tpu_custom_call.1} parent=1 // pred_check_branch
      %49 = sbr.rel (0) target = $region25
    $region24: #{tpu_custom_call.1} parent=1 // pred_region
      %50 = dma.done [#allocation6], 384
    $region25: #{tpu_custom_call.1} parent=1 // pred_fallthru
      _
    // Predicated region
    $region26: #{tpu_custom_call.1} parent=1 // pred_check
      _
    $region27: #{tpu_custom_call.1} parent=1 // pred_check_branch
      %52 = sbr.rel (0) target = $region29
    $region28: #{tpu_custom_call.1} parent=1 // pred_region
      %53 = dma.done [#allocation6], 6144
    $region29: #{tpu_custom_call.1} parent=1 // pred_fallthru
      _
    %p55 = scmp.eq.s32.totalorder 0, 0
    // Predicated region
    $region30: #{tpu_custom_call.1} parent=1 // pred_check
      %p56 = pneg %p55
    $region31: #{tpu_custom_call.1} parent=1 // pred_check_branch
      %58 = sbr.rel (%p56) target = $region33
    $region32: #{tpu_custom_call.1} parent=1 // pred_region
      %59 = vst [vmem:[#allocation2] sm:$0xff] 0.0
    $region33: #{tpu_custom_call.1} parent=1 // pred_fallthru
      _
    %v60 = vld [vmem:[#allocation2] sm:$0xff]
    %v61 = vld [vmem:[#allocation5] sm:$0xff]
    %v62 = vld [vmem:[#allocation5 + $0x8] sm:$0xff]
    %v63 = vld [vmem:[#allocation5 + $0x10] sm:$0xff]
    %v64 = vld [vmem:[#allocation7] sm:$0xf]
    %v65 = vld [vmem:[#allocation7 + $0x4] sm:$0xf]
    %v66 = vld [vmem:[#allocation7 + $0x8] sm:$0xf]
    %v67 = vld [vmem:[#allocation7 + $0xc] sm:$0xf]
    %v68 = vld [vmem:[#allocation7 + $0x10] sm:$0xf]
    %v69 = vld [vmem:[#allocation7 + $0x14] sm:$0xf]
    %v70 = vld [vmem:[#allocation7 + $0x18] sm:$0xf]
    %v71 = vld [vmem:[#allocation7 + $0x1c] sm:$0xf]
    %v72 = vld [vmem:[#allocation7 + $0x20] sm:$0xf]
    %v73 = vld [vmem:[#allocation7 + $0x24] sm:$0xf]
    %v74 = vld [vmem:[#allocation7 + $0x28] sm:$0xf]
    %v75 = vld [vmem:[#allocation7 + $0x2c] sm:$0xf]
    %v76 = vld [vmem:[#allocation7 + $0x30] sm:$0xf]
    %v77 = vld [vmem:[#allocation7 + $0x34] sm:$0xf]
    %v78 = vld [vmem:[#allocation7 + $0x38] sm:$0xf]
    %v79 = vld [vmem:[#allocation7 + $0x3c] sm:$0xf]
    %v80 = vld [vmem:[#allocation7 + $0x40] sm:$0xf]
    %v81 = vld [vmem:[#allocation7 + $0x44] sm:$0xf]
    %v82 = vld [vmem:[#allocation7 + $0x48] sm:$0xf]
    %v83 = vld [vmem:[#allocation7 + $0x4c] sm:$0xf]
    %v84 = vld [vmem:[#allocation7 + $0x50] sm:$0xf]
    %v85 = vld [vmem:[#allocation7 + $0x54] sm:$0xf]
    %v86 = vld [vmem:[#allocation7 + $0x58] sm:$0xf]
    %v87 = vld [vmem:[#allocation7 + $0x5c] sm:$0xf]
    %v88 = vld [vmem:[#allocation7 + $0x60] sm:$0xf]
    %v89 = vld [vmem:[#allocation7 + $0x64] sm:$0xf]
    %v90 = vld [vmem:[#allocation7 + $0x68] sm:$0xf]
    %v91 = vld [vmem:[#allocation7 + $0x6c] sm:$0xf]
    %v92 = vld [vmem:[#allocation7 + $0x70] sm:$0xf]
    %v93 = vld [vmem:[#allocation7 + $0x74] sm:$0xf]
    %v94 = vld [vmem:[#allocation7 + $0x78] sm:$0xf]
    %v95 = vld [vmem:[#allocation7 + $0x7c] sm:$0xf]
    %v96 = vld [vmem:[#allocation7 + $0x80] sm:$0xf]
    %v97 = vld [vmem:[#allocation7 + $0x84] sm:$0xf]
    %v98 = vld [vmem:[#allocation7 + $0x88] sm:$0xf]
    %v99 = vld [vmem:[#allocation7 + $0x8c] sm:$0xf]
    %v100 = vld [vmem:[#allocation7 + $0x90] sm:$0xf]
    %v101 = vld [vmem:[#allocation7 + $0x94] sm:$0xf]
    %v102 = vld [vmem:[#allocation7 + $0x98] sm:$0xf]
    %v103 = vld [vmem:[#allocation7 + $0x9c] sm:$0xf]
    %v104 = vld [vmem:[#allocation7 + $0xa0] sm:$0xf]
    %v105 = vld [vmem:[#allocation7 + $0xa4] sm:$0xf]
    %v106 = vld [vmem:[#allocation7 + $0xa8] sm:$0xf]
    %v107 = vld [vmem:[#allocation7 + $0xac] sm:$0xf]
    %v108 = vld [vmem:[#allocation7 + $0xb0] sm:$0xf]
    %v109 = vld [vmem:[#allocation7 + $0xb4] sm:$0xf]
    %v110 = vld [vmem:[#allocation7 + $0xb8] sm:$0xf]
    %v111 = vld [vmem:[#allocation7 + $0xbc] sm:$0xf]
    %v112 = vld [vmem:[#allocation7 + $0xc0] sm:$0xf]
    %v113 = vld [vmem:[#allocation7 + $0xc4] sm:$0xf]
    %v114 = vld [vmem:[#allocation7 + $0xc8] sm:$0xf]
    %v115 = vld [vmem:[#allocation7 + $0xcc] sm:$0xf]
    %v116 = vld [vmem:[#allocation7 + $0xd0] sm:$0xf]
    %v117 = vld [vmem:[#allocation7 + $0xd4] sm:$0xf]
    %v118 = vld [vmem:[#allocation7 + $0xd8] sm:$0xf]
    %v119 = vld [vmem:[#allocation7 + $0xdc] sm:$0xf]
    %v120 = vld [vmem:[#allocation7 + $0xe0] sm:$0xf]
    %v121 = vld [vmem:[#allocation7 + $0xe4] sm:$0xf]
    %v122 = vld [vmem:[#allocation7 + $0xe8] sm:$0xf]
    %v123 = vld [vmem:[#allocation7 + $0xec] sm:$0xf]
    %v124 = vld [vmem:[#allocation7 + $0xf0] sm:$0xf]
    %v125 = vld [vmem:[#allocation7 + $0xf4] sm:$0xf]
    %v126 = vld [vmem:[#allocation7 + $0xf8] sm:$0xf]
    %v127 = vld [vmem:[#allocation7 + $0xfc] sm:$0xf]
    %v128 = vld [vmem:[#allocation7 + $0x100] sm:$0xf]
    %v129 = vld [vmem:[#allocation7 + $0x104] sm:$0xf]
    %v130 = vld [vmem:[#allocation7 + $0x108] sm:$0xf]
    %v131 = vld [vmem:[#allocation7 + $0x10c] sm:$0xf]
    %v132 = vld [vmem:[#allocation7 + $0x110] sm:$0xf]
    %v133 = vld [vmem:[#allocation7 + $0x114] sm:$0xf]
    %v134 = vld [vmem:[#allocation7 + $0x118] sm:$0xf]
    %v135 = vld [vmem:[#allocation7 + $0x11c] sm:$0xf]
    %v136 = vld [vmem:[#allocation7 + $0x120] sm:$0xf]
    %v137 = vld [vmem:[#allocation7 + $0x124] sm:$0xf]
    %v138 = vld [vmem:[#allocation7 + $0x128] sm:$0xf]
    %v139 = vld [vmem:[#allocation7 + $0x12c] sm:$0xf]
    %v140 = vld [vmem:[#allocation7 + $0x130] sm:$0xf]
    %v141 = vld [vmem:[#allocation7 + $0x134] sm:$0xf]
    %v142 = vld [vmem:[#allocation7 + $0x138] sm:$0xf]
    %v143 = vld [vmem:[#allocation7 + $0x13c] sm:$0xf]
    %v144 = vld [vmem:[#allocation7 + $0x140] sm:$0xf]
    %v145 = vld [vmem:[#allocation7 + $0x144] sm:$0xf]
    %v146 = vld [vmem:[#allocation7 + $0x148] sm:$0xf]
    %v147 = vld [vmem:[#allocation7 + $0x14c] sm:$0xf]
    %v148 = vld [vmem:[#allocation7 + $0x150] sm:$0xf]
    %v149 = vld [vmem:[#allocation7 + $0x154] sm:$0xf]
    %v150 = vld [vmem:[#allocation7 + $0x158] sm:$0xf]
    %v151 = vld [vmem:[#allocation7 + $0x15c] sm:$0xf]
    %v152 = vld [vmem:[#allocation7 + $0x160] sm:$0xf]
    %v153 = vld [vmem:[#allocation7 + $0x164] sm:$0xf]
    %v154 = vld [vmem:[#allocation7 + $0x168] sm:$0xf]
    %v155 = vld [vmem:[#allocation7 + $0x16c] sm:$0xf]
    %v156 = vld [vmem:[#allocation7 + $0x170] sm:$0xf]
    %v157 = vld [vmem:[#allocation7 + $0x174] sm:$0xf]
    %v158 = vld [vmem:[#allocation7 + $0x178] sm:$0xf]
    %v159 = vld [vmem:[#allocation7 + $0x17c] sm:$0xf]
    %v163 = vunpack.c.l.b16 %v61
    %v164 = vunpack.c.h.b16 %v61
    %v165 = vunpack.c.l.b16 %v62
    %v166 = vunpack.c.h.b16 %v62
    %v167 = vunpack.c.l.b16 %v63
    %v168 = vunpack.c.h.b16 %v63
    %v169 = vpack.c.b16 %v163, %v163
    %v170 = vpack.c.b16 %v164, %v164
    %v171 = vpack.c.b16 %v165, %v165
    %v172 = vpack.c.b16 %v166, %v166
    %v173 = vpack.c.b16 %v167, %v167
    %v174 = vpack.c.b16 %v168, %v168
    %v277 = vunpack.c.l.b16 %v64
    %v278 = vunpack.c.l.b16 %v65
    %v279 = vunpack.c.l.b16 %v66
    %v280 = vunpack.c.l.b16 %v67
    %v281 = vunpack.c.l.b16 %v68
    %v282 = vunpack.c.l.b16 %v69
    %v283 = vunpack.c.l.b16 %v70
    %v284 = vunpack.c.l.b16 %v71
    %v285 = vunpack.c.l.b16 %v72
    %v286 = vunpack.c.l.b16 %v73
    %v287 = vunpack.c.l.b16 %v74
    %v288 = vunpack.c.l.b16 %v75
    %v289 = vunpack.c.l.b16 %v76
    %v290 = vunpack.c.l.b16 %v77
    %v291 = vunpack.c.l.b16 %v78
    %v292 = vunpack.c.l.b16 %v79
    %v293 = vunpack.c.l.b16 %v80
    %v294 = vunpack.c.l.b16 %v81
    %v295 = vunpack.c.l.b16 %v82
    %v296 = vunpack.c.l.b16 %v83
    %v297 = vunpack.c.l.b16 %v84
    %v298 = vunpack.c.l.b16 %v85
    %v299 = vunpack.c.l.b16 %v86
    %v300 = vunpack.c.l.b16 %v87
    %v301 = vunpack.c.l.b16 %v88
    %v302 = vunpack.c.l.b16 %v89
    %v303 = vunpack.c.l.b16 %v90
    %v304 = vunpack.c.l.b16 %v91
    %v305 = vunpack.c.l.b16 %v92
    %v306 = vunpack.c.l.b16 %v93
    %v307 = vunpack.c.l.b16 %v94
    %v308 = vunpack.c.l.b16 %v95
    %v309 = vunpack.c.l.b16 %v96
    %v310 = vunpack.c.l.b16 %v97
    %v311 = vunpack.c.l.b16 %v98
    %v312 = vunpack.c.l.b16 %v99
    %v313 = vunpack.c.l.b16 %v100
    %v314 = vunpack.c.l.b16 %v101
    %v315 = vunpack.c.l.b16 %v102
    %v316 = vunpack.c.l.b16 %v103
    %v317 = vunpack.c.l.b16 %v104
    %v318 = vunpack.c.l.b16 %v105
    %v319 = vunpack.c.l.b16 %v106
    %v320 = vunpack.c.l.b16 %v107
    %v321 = vunpack.c.l.b16 %v108
    %v322 = vunpack.c.l.b16 %v109
    %v323 = vunpack.c.l.b16 %v110
    %v324 = vunpack.c.l.b16 %v111
    %v325 = vunpack.c.l.b16 %v112
    %v326 = vunpack.c.l.b16 %v113
    %v327 = vunpack.c.l.b16 %v114
    %v328 = vunpack.c.l.b16 %v115
    %v329 = vunpack.c.l.b16 %v116
    %v330 = vunpack.c.l.b16 %v117
    %v331 = vunpack.c.l.b16 %v118
    %v332 = vunpack.c.l.b16 %v119
    %v333 = vunpack.c.l.b16 %v120
    %v334 = vunpack.c.l.b16 %v121
    %v335 = vunpack.c.l.b16 %v122
    %v336 = vunpack.c.l.b16 %v123
    %v337 = vunpack.c.l.b16 %v124
    %v338 = vunpack.c.l.b16 %v125
    %v339 = vunpack.c.l.b16 %v126
    %v340 = vunpack.c.l.b16 %v127
    %v341 = vunpack.c.l.b16 %v128
    %v342 = vunpack.c.l.b16 %v129
    %v343 = vunpack.c.l.b16 %v130
    %v344 = vunpack.c.l.b16 %v131
    %v345 = vunpack.c.l.b16 %v132
    %v346 = vunpack.c.l.b16 %v133
    %v347 = vunpack.c.l.b16 %v134
    %v348 = vunpack.c.l.b16 %v135
    %v349 = vunpack.c.l.b16 %v136
    %v350 = vunpack.c.l.b16 %v137
    %v351 = vunpack.c.l.b16 %v138
    %v352 = vunpack.c.l.b16 %v139
    %v353 = vunpack.c.l.b16 %v140
    %v354 = vunpack.c.l.b16 %v141
    %v355 = vunpack.c.l.b16 %v142
    %v356 = vunpack.c.l.b16 %v143
    %v357 = vunpack.c.l.b16 %v144
    %v358 = vunpack.c.l.b16 %v145
    %v359 = vunpack.c.l.b16 %v146
    %v360 = vunpack.c.l.b16 %v147
    %v361 = vunpack.c.l.b16 %v148
    %v362 = vunpack.c.l.b16 %v149
    %v363 = vunpack.c.l.b16 %v150
    %v364 = vunpack.c.l.b16 %v151
    %v365 = vunpack.c.l.b16 %v152
    %v366 = vunpack.c.l.b16 %v153
    %v367 = vunpack.c.l.b16 %v154
    %v368 = vunpack.c.l.b16 %v155
    %v369 = vunpack.c.l.b16 %v156
    %v370 = vunpack.c.l.b16 %v157
    %v371 = vunpack.c.l.b16 %v158
    %v372 = vunpack.c.l.b16 %v159
    %v373 = vpack.c.b16 %v278, %v277
    %v374 = vpack.c.b16 %v280, %v279
    %v375 = vpack.c.b16 %v282, %v281
    %v376 = vpack.c.b16 %v284, %v283
    %v377 = vpack.c.b16 %v286, %v285
    %v378 = vpack.c.b16 %v288, %v287
    %v379 = vpack.c.b16 %v290, %v289
    %v380 = vpack.c.b16 %v292, %v291
    %v381 = vpack.c.b16 %v294, %v293
    %v382 = vpack.c.b16 %v296, %v295
    %v383 = vpack.c.b16 %v298, %v297
    %v384 = vpack.c.b16 %v300, %v299
    %v385 = vpack.c.b16 %v302, %v301
    %v386 = vpack.c.b16 %v304, %v303
    %v387 = vpack.c.b16 %v306, %v305
    %v388 = vpack.c.b16 %v308, %v307
    %v389 = vpack.c.b16 %v310, %v309
    %v390 = vpack.c.b16 %v312, %v311
    %v391 = vpack.c.b16 %v314, %v313
    %v392 = vpack.c.b16 %v316, %v315
    %v393 = vpack.c.b16 %v318, %v317
    %v394 = vpack.c.b16 %v320, %v319
    %v395 = vpack.c.b16 %v322, %v321
    %v396 = vpack.c.b16 %v324, %v323
    %v397 = vpack.c.b16 %v326, %v325
    %v398 = vpack.c.b16 %v328, %v327
    %v399 = vpack.c.b16 %v330, %v329
    %v400 = vpack.c.b16 %v332, %v331
    %v401 = vpack.c.b16 %v334, %v333
    %v402 = vpack.c.b16 %v336, %v335
    %v403 = vpack.c.b16 %v338, %v337
    %v404 = vpack.c.b16 %v340, %v339
    %v405 = vpack.c.b16 %v342, %v341
    %v406 = vpack.c.b16 %v344, %v343
    %v407 = vpack.c.b16 %v346, %v345
    %v408 = vpack.c.b16 %v348, %v347
    %v409 = vpack.c.b16 %v350, %v349
    %v410 = vpack.c.b16 %v352, %v351
    %v411 = vpack.c.b16 %v354, %v353
    %v412 = vpack.c.b16 %v356, %v355
    %v413 = vpack.c.b16 %v358, %v357
    %v414 = vpack.c.b16 %v360, %v359
    %v415 = vpack.c.b16 %v362, %v361
    %v416 = vpack.c.b16 %v364, %v363
    %v417 = vpack.c.b16 %v366, %v365
    %v418 = vpack.c.b16 %v368, %v367
    %v419 = vpack.c.b16 %v370, %v369
    %v420 = vpack.c.b16 %v372, %v371
    %469 = vmatprep.subr.bf16.mxu0 0
    %470 = vmatpush1.bf16.msra.mxu0 %v373
    %471 = vmatprep.subr.bf16.mxu0 0
    %472 = vmatpush1.bf16.msra.mxu0 %v374
    %473 = vmatprep.subr.bf16.mxu0 0
    %474 = vmatpush1.bf16.msra.mxu0 %v375
    %475 = vmatprep.subr.bf16.mxu0 0
    %476 = vmatpush1.bf16.msra.mxu0 %v376
    %477 = vmatprep.subr.bf16.mxu0 0
    %478 = vmatpush1.bf16.msra.mxu0 %v377
    %479 = vmatprep.subr.bf16.mxu0 0
    %480 = vmatpush1.bf16.msra.mxu0 %v378
    %481 = vmatprep.subr.bf16.mxu0 0
    %482 = vmatpush1.bf16.msra.mxu0 %v379
    %483 = vmatprep.subr.bf16.mxu0 0
    %484 = vmatpush1.bf16.msra.mxu0 %v380
    %485 = vmatprep.subr.bf16.mxu0 0
    %486 = vmatpush1.bf16.msra.mxu0 %v381
    %487 = vmatprep.subr.bf16.mxu0 0
    %488 = vmatpush1.bf16.msra.mxu0 %v382
    %489 = vmatprep.subr.bf16.mxu0 0
    %490 = vmatpush1.bf16.msra.mxu0 %v383
    %491 = vmatprep.subr.bf16.mxu0 0
    %492 = vmatpush1.bf16.msra.mxu0 %v384
    %493 = vmatprep.subr.bf16.mxu0 0
    %494 = vmatpush1.bf16.msra.mxu0 %v385
    %495 = vmatprep.subr.bf16.mxu0 0
    %496 = vmatpush1.bf16.msra.mxu0 %v386
    %497 = vmatprep.subr.bf16.mxu0 0
    %498 = vmatpush1.bf16.msra.mxu0 %v387
    %499 = vmatprep.subr.bf16.mxu0 0
    %500 = vmatpush1.bf16.msra.mxu0 %v388
    %501 = vmatprep.mubr.bf16.mxu0 %v170
    %502 = vmatmul.mubr.bf16.gmra.mrb[0].mxu0 %v169
    %v503 = vpop.f32.mrb[0].mxu0
    %v504 = vadd.f32 0.0, %v503
    %v505 = vpop.f32.mrb[0].mxu0
    %v506 = vpop.f32.mrb[0].mxu0
    %v507 = vpop.f32.mrb[0].mxu0
    %508 = vdwg.mxu0
    %509 = vmatprep.subr.bf16.mxu0 0
    %510 = vmatpush1.bf16.msra.mxu0 %v389
    %511 = vmatprep.subr.bf16.mxu0 0
    %512 = vmatpush1.bf16.msra.mxu0 %v390
    %513 = vmatprep.subr.bf16.mxu0 0
    %514 = vmatpush1.bf16.msra.mxu0 %v391
    %515 = vmatprep.subr.bf16.mxu0 0
    %516 = vmatpush1.bf16.msra.mxu0 %v392
    %517 = vmatprep.subr.bf16.mxu0 0
    %518 = vmatpush1.bf16.msra.mxu0 %v393
    %519 = vmatprep.subr.bf16.mxu0 0
    %520 = vmatpush1.bf16.msra.mxu0 %v394
    %521 = vmatprep.subr.bf16.mxu0 0
    %522 = vmatpush1.bf16.msra.mxu0 %v395
    %523 = vmatprep.subr.bf16.mxu0 0
    %524 = vmatpush1.bf16.msra.mxu0 %v396
    %525 = vmatprep.subr.bf16.mxu0 0
    %526 = vmatpush1.bf16.msra.mxu0 %v397
    %527 = vmatprep.subr.bf16.mxu0 0
    %528 = vmatpush1.bf16.msra.mxu0 %v398
    %529 = vmatprep.subr.bf16.mxu0 0
    %530 = vmatpush1.bf16.msra.mxu0 %v399
    %531 = vmatprep.subr.bf16.mxu0 0
    %532 = vmatpush1.bf16.msra.mxu0 %v400
    %533 = vmatprep.subr.bf16.mxu0 0
    %534 = vmatpush1.bf16.msra.mxu0 %v401
    %535 = vmatprep.subr.bf16.mxu0 0
    %536 = vmatpush1.bf16.msra.mxu0 %v402
    %537 = vmatprep.subr.bf16.mxu0 0
    %538 = vmatpush1.bf16.msra.mxu0 %v403
    %539 = vmatprep.subr.bf16.mxu0 0
    %540 = vmatpush1.bf16.msra.mxu0 %v404
    %541 = vmatprep.mubr.bf16.mxu0 %v172
    %542 = vmatmul.mubr.bf16.gmra.mrb[0].mxu0 %v171
    %v543 = vpop.f32.mrb[0].mxu0
    %v544 = vadd.f32 %v504, %v543
    %v545 = vpop.f32.mrb[0].mxu0
    %v546 = vpop.f32.mrb[0].mxu0
    %v547 = vpop.f32.mrb[0].mxu0
    %548 = vdwg.mxu0
    %549 = vmatprep.subr.bf16.mxu0 0
    %550 = vmatpush1.bf16.msra.mxu0 %v405
    %551 = vmatprep.subr.bf16.mxu0 0
    %552 = vmatpush1.bf16.msra.mxu0 %v406
    %553 = vmatprep.subr.bf16.mxu0 0
    %554 = vmatpush1.bf16.msra.mxu0 %v407
    %555 = vmatprep.subr.bf16.mxu0 0
    %556 = vmatpush1.bf16.msra.mxu0 %v408
    %557 = vmatprep.subr.bf16.mxu0 0
    %558 = vmatpush1.bf16.msra.mxu0 %v409
    %559 = vmatprep.subr.bf16.mxu0 0
    %560 = vmatpush1.bf16.msra.mxu0 %v410
    %561 = vmatprep.subr.bf16.mxu0 0
    %562 = vmatpush1.bf16.msra.mxu0 %v411
    %563 = vmatprep.subr.bf16.mxu0 0
    %564 = vmatpush1.bf16.msra.mxu0 %v412
    %565 = vmatprep.subr.bf16.mxu0 0
    %566 = vmatpush1.bf16.msra.mxu0 %v413
    %567 = vmatprep.subr.bf16.mxu0 0
    %568 = vmatpush1.bf16.msra.mxu0 %v414
    %569 = vmatprep.subr.bf16.mxu0 0
    %570 = vmatpush1.bf16.msra.mxu0 %v415
    %571 = vmatprep.subr.bf16.mxu0 0
    %572 = vmatpush1.bf16.msra.mxu0 %v416
    %573 = vmatprep.subr.bf16.mxu0 0
    %574 = vmatpush1.bf16.msra.mxu0 %v417
    %575 = vmatprep.subr.bf16.mxu0 0
    %576 = vmatpush1.bf16.msra.mxu0 %v418
    %577 = vmatprep.subr.bf16.mxu0 0
    %578 = vmatpush1.bf16.msra.mxu0 %v419
    %579 = vmatprep.subr.bf16.mxu0 0
    %580 = vmatpush1.bf16.msra.mxu0 %v420
    %581 = vmatprep.mubr.bf16.mxu0 %v174
    %582 = vmatmul.mubr.bf16.gmra.mrb[0].mxu0 %v173
    %v583 = vpop.f32.mrb[0].mxu0
    %v584 = vadd.f32 %v544, %v583
    %v585 = vpop.f32.mrb[0].mxu0
    %v586 = vpop.f32.mrb[0].mxu0
    %v587 = vpop.f32.mrb[0].mxu0
    %588 = vdwg.mxu0
    %v589 = vadd.f32 %v60, %v584
    %590 = vst [vmem:[#allocation2] sm:$0xff] %v589
    // Predicated region
    $region34: #{tpu_custom_call.1} parent=1 // pred_check
      %p591 = pneg %p55
    $region35: #{tpu_custom_call.1} parent=1 // pred_check_branch
      %593 = sbr.rel (%p591) target = $region37
    $region36: #{tpu_custom_call.1} parent=1 // pred_region
      %v594 = vld [vmem:[#allocation2] sm:$0xff]
      %v595 = vmul.f32 %v594, 2.0
      %v596 = vld [vmem:[%s1] sm:$0x1]
      %v598 = vlaneseq
      %v599 = vshrl.u32 %v598, 7
      %v600 = vsub.s32 0, %v599
      %v601 = vrot.slane %v596, %v600
      %v603 = vsub.f32 %v595, %v601
      %v604 = vld [vmem:[#allocation3] sm:$0x1]
      %v606 = vlaneseq
      %v607 = vshrl.u32 %v606, 7
      %v608 = vsub.s32 0, %v607
      %v609 = vrot.slane %v604, %v608
      %v611 = vmul.f32 %v603, %v609
      %612 = vadd.xlane.f32.xlu0 %v611
      %v613 = vpop.xlane.xlu0 %612
      %v614 = vmul.f32 %v603, %v603
      %615 = vadd.xlane.f32.xlu0 %v614
      %v616 = vpop.xlane.xlu0 %615
      %v617 = vrsqrt.pop %v616
      %v618 = vmul.f32 %v616, %v617
      %vm619 = vcmp.eq.f32.partialorder %v616, inf
      %v620 = vsel %vm619, %v616, %v618
      %vm621 = vcmp.eq.f32.partialorder %v616, 0.0
      %v622 = vand.u32 %v616, 2147483648
      %v623 = vsel %vm621, %v622, %v620
      %v624 = vmul.f32 %v604, %v604
      %vm625 = vcmask 1040384
      %v626 = vsel %vm625, %v624, 0.0
      %627 = vadd.xlane.f32.xlu0 %v626
      %v628 = vpop.xlane.xlu0 %627
      %v629 = vrsqrt.pop %v628
      %v630 = vmul.f32 %v628, %v629
      %vm631 = vcmp.eq.f32.partialorder %v628, inf
      %v632 = vsel %vm631, %v628, %v630
      %vm633 = vcmp.eq.f32.partialorder %v628, 0.0
      %v634 = vand.u32 %v628, 2147483648
      %v635 = vsel %vm633, %v634, %v632
      %v636 = vlaneseq
      %v637 = vshrl.u32 %v636, 7
      %v638 = vsub.s32 0, %v637
      %v639 = vrot.slane %v635, %v638
      %v640 = vmul.f32 %v623, %v639
      %v641 = vmax.f32 %v640, 1e-12
      %v642 = vrcp.pop %v641
      %v643 = vmul.f32 %v613, %v642
      %vm644 = vcmask 7168
      %645 = vst.msk [vmem:[%s4] sm:$0xff] %vm644, %v643
    $region37: #{tpu_custom_call.1} parent=1 // pred_fallthru
      _
    // Predicated region
    $region38: #{tpu_custom_call.1} parent=1 // pred_check
      _
    $region39: #{tpu_custom_call.1} parent=1 // pred_check_branch
      %647 = sbr.rel (0) target = $region41
    $region40: #{tpu_custom_call.1} parent=1 // pred_region
      _
    $region41: #{tpu_custom_call.1} parent=1 // pred_fallthru
      _
    // Predicated region
    $region42: #{tpu_custom_call.1} parent=1 // pred_check
      _
    $region43: #{tpu_custom_call.1} parent=1 // pred_check_branch
      %649 = sbr.rel (0) target = $region45
    $region44: #{tpu_custom_call.1} parent=1 // pred_region
      _
    $region45: #{tpu_custom_call.1} parent=1 // pred_fallthru
      _
    %650 = vsyncpa [#allocation4], 1
    %651 = vsyncpa [#allocation6], 1

</llo_original>
